<compile_context>
chip_gen: v5e
topology: v5e:2x2
jax: 0.10.0
libtpu: 0.0.40
codegen_flags: <defaults>
</compile_context>

<pallas_src>
import functools
import numpy as np

import jax
import jax.numpy as jnp
from jax.experimental import pallas as pl
from jax.experimental.pallas import tpu as pltpu

EPS = 1e-5          # PyTorch nn.LayerNorm default eps
NEG_INF = -1e30     # stands in for masked_fill(-inf); fully-padded query rows get a
                    # uniform softmax instead of NaN but are zeroed by the non-pad mask.


# ----------------------------------------------------------------------------
# shared math helper (used in kernels and in the pure-JAX reference)
# ----------------------------------------------------------------------------
def _layernorm(x, gamma, beta):
    mu = jnp.mean(x, axis=-1, keepdims=True)
    var = jnp.mean((x - mu) ** 2, axis=-1, keepdims=True)
    return (x - mu) * jax.lax.rsqrt(var + EPS) * gamma + beta


# ----------------------------------------------------------------------------
# single-buffered weight BlockSpecs (capability-probed once, with fallback)
# ----------------------------------------------------------------------------
def _probe_kernel(x_ref, o_ref):
    o_ref[...] = x_ref[...] + 1.0


@functools.lru_cache(maxsize=None)
def _single_buffered_supported():
    """One-time probe: does this Pallas accept pipeline_mode=pl.Buffered(1) on TPU?"""
    try:
        spec = pl.BlockSpec((8, 128), lambda i: (0, 0), pipeline_mode=pl.Buffered(1))
        fn = pl.pallas_call(
            _probe_kernel,
            out_shape=jax.ShapeDtypeStruct((8, 128), jnp.float32),
            grid=(1,),
            in_specs=[spec],
            out_specs=pl.BlockSpec((8, 128), lambda i: (0, 0)),
        )
        jax.block_until_ready(fn(jnp.zeros((8, 128), jnp.float32)))
        return True
    except Exception:
        return False


def _weight_spec(shape):
    """Whole-array block, broadcast across every grid axis (ignores prefetch refs).
    Single-buffered when supported: the block index never changes, so double
    buffering only wastes VMEM."""
    n = len(shape)
    idx = lambda *_, _n=n: (0,) * _n
    if _single_buffered_supported():
        return pl.BlockSpec(shape, idx, pipeline_mode=pl.Buffered(1))
    return pl.BlockSpec(shape, idx)


# ----------------------------------------------------------------------------
# Kernel 1: input projection  (linear_in -> LayerNorm -> + positional encoding)
# ----------------------------------------------------------------------------
def inproj_kernel(x_ref, w_ref, b_ref, g_ref, bb_ref, pe_ref, o_ref):
    x = x_ref[0]                                                        # (tq, Din) bf16
    y = jnp.dot(x, w_ref[...], preferred_element_type=jnp.float32) + b_ref[...]
    y = _layernorm(y, g_ref[...], bb_ref[...]) + pe_ref[...]            # f32
    o_ref[0] = y.astype(o_ref.dtype)


# ----------------------------------------------------------------------------
# Kernel 2: one full encoder layer (MHA sublayer + position-wise FFN), fused.
# ----------------------------------------------------------------------------
def encoder_layer_kernel(lens_ref,                                      # SMEM (N,)
                         x_ref,                                         # (1, T, D) bf16
                         wq_ref, bq_ref, wk_ref, bk_ref, wv_ref, bv_ref,
                         wfc_ref, bfc_ref, g1_ref, bb1_ref,
                         w1_ref, b1_ref, w2_ref, b2_ref, g2_ref, bb2_ref,
                         o_ref,                                         # (1, tq, D) bf16
                         k_scr, v_scr,                                  # (T, H*d_k)/(T, H*d_v) bf16
                         *, n_head, d_k, d_v, tq):
    b = pl.program_id(0)
    qi = pl.program_id(1)
    T = x_ref.shape[1]
    D = x_ref.shape[2]
    nq = T // tq
    length = lens_ref[b]

    # ---- K / V projections: once per batch element, lane-dense scratch,
    #      computed in tq-row chunks to bound the transient f32 temporaries.
    @pl.when(qi == 0)
    def _():
        for c in range(nq):                                             # static chunk loop
            xc = x_ref[0, c * tq:(c + 1) * tq, :]                       # (tq, D) bf16
            kc = jnp.dot(xc, wk_ref[...], preferred_element_type=jnp.float32) + bk_ref[...]
            vc = jnp.dot(xc, wv_ref[...], preferred_element_type=jnp.float32) + bv_ref[...]
            k_scr[c * tq:(c + 1) * tq, :] = kc.astype(k_scr.dtype)      # full-width store
            v_scr[c * tq:(c + 1) * tq, :] = vc.astype(v_scr.dtype)

    tile_active = qi * tq < length          # does this query tile contain any valid row?

    @pl.when(tile_active)
    def _():
        # ---- masks built in-kernel from the prefetched length scalar (no HBM masks)
        key_pad = jax.lax.broadcasted_iota(jnp.int32, (1, T), 1) >= length       # (1, T)
        mask_add = jnp.where(key_pad, NEG_INF, 0.0)                              # hoisted
        row_idx = jax.lax.broadcasted_iota(jnp.int32, (tq, 1), 0) + qi * tq
        npm = (row_idx < length).astype(jnp.float32)                             # (tq, 1)

        # ---- current query tile
        start = pl.multiple_of(qi * tq, tq)
        x_t = x_ref[0, pl.ds(start, tq), :]                                      # (tq, D) bf16
        x32 = x_t.astype(jnp.float32)

        inv_temp = 1.0 / float(np.sqrt(d_k))
        # 1/sqrt(d_k) folded into q once per tile (not per-head on the (tq, T) slab)
        q_all = (jnp.dot(x_t, wq_ref[...], preferred_element_type=jnp.float32)
                 + bq_ref[...]) * inv_temp

        # ---- per-head scaled-dot-product attention (unrolled; switch to
        #      lax.fori_loop only if vreg spills show up in the bundle dump)
        ctx_heads = []
        for h in range(n_head):
            q_h = q_all[:, h * d_k:(h + 1) * d_k].astype(jnp.bfloat16)
            k_h = k_scr[:, h * d_k:(h + 1) * d_k]
            s = jax.lax.dot_general(q_h, k_h, (((1,), (1,)), ((), ())),
                                    preferred_element_type=jnp.float32)          # (tq, T)
            s = s + mask_add
            p_un = jnp.exp(s - jnp.max(s, axis=-1, keepdims=True))               # f32 (portable)
            inv_den = pl.reciprocal(jnp.sum(p_un, axis=-1, keepdims=True), approx=True)
            ctx = jnp.dot(p_un.astype(jnp.bfloat16), v_scr[:, h * d_v:(h + 1) * d_v],
                          preferred_element_type=jnp.float32) * inv_den          # (tq, d_v)
            ctx_heads.append(ctx)

        # one deep output projection instead of n_head shallow ones
        ctx_all = jnp.concatenate(ctx_heads, axis=-1).astype(jnp.bfloat16)       # (tq, H*d_v)
        attn_out = jnp.dot(ctx_all, wfc_ref[...],
                           preferred_element_type=jnp.float32) + bfc_ref[...]

        # residual + LayerNorm + non-pad mask (all f32)
        attn = _layernorm(attn_out + x32, g1_ref[...], bb1_ref[...]) * npm

        # ---- position-wise FFN (ReLU MLP) + residual + LayerNorm + non-pad mask
        a_bf = attn.astype(jnp.bfloat16)
        h1 = jnp.maximum(
            jnp.dot(a_bf, w1_ref[...], preferred_element_type=jnp.float32) + b1_ref[...], 0.0)
        y = jnp.dot(h1.astype(jnp.bfloat16), w2_ref[...],
                    preferred_element_type=jnp.float32) + b2_ref[...]
        y = _layernorm(y + attn, g2_ref[...], bb2_ref[...]) * npm
        o_ref[0] = y.astype(o_ref.dtype)

    @pl.when(jnp.logical_not(tile_active))
    def _():
        # fully-padded query tile: the reference output is exactly zero (non-pad mask)
        o_ref[...] = jnp.zeros(o_ref.shape, o_ref.dtype)


# ----------------------------------------------------------------------------
# pallas_call wrappers
# ----------------------------------------------------------------------------
def inproj_pallas(x, w, b, g, bb, pe, *, tq):
    N, T, Din = x.shape
    Dm = w.shape[1]
    nq = T // tq
    return pl.pallas_call(
        inproj_kernel,
        out_shape=jax.ShapeDtypeStruct((N, T, Dm), jnp.bfloat16),
        grid=(N, nq),
        in_specs=[
            pl.BlockSpec((1, tq, Din), lambda i, j: (i, j, 0)),
            _weight_spec(w.shape), _weight_spec(b.shape),
            _weight_spec(g.shape), _weight_spec(bb.shape),
            pl.BlockSpec((tq, Dm), lambda i, j: (j, 0)),
        ],
        out_specs=pl.BlockSpec((1, tq, Dm), lambda i, j: (i, j, 0)),
        compiler_params=pltpu.CompilerParams(
            dimension_semantics=("parallel", "parallel"),
            vmem_limit_bytes=32 * 1024 * 1024),
    )(x, w, b, g, bb, pe)


def encoder_layer_pallas(x, lengths, p, *, n_head, d_k, d_v, tq):
    N, T, D = x.shape
    nq = T // tq
    kern = functools.partial(encoder_layer_kernel, n_head=n_head, d_k=d_k,
                             d_v=d_v, tq=tq)
    weights = (p["wq"], p["bq"], p["wk"], p["bk"], p["wv"], p["bv"],
               p["wfc"], p["bfc"], p["g1"], p["b1n"],
               p["w1"], p["b1"], p["w2"], p["b2"], p["g2"], p["b2n"])
    grid_spec = pltpu.PrefetchScalarGridSpec(
        num_scalar_prefetch=1,
        grid=(N, nq),
        in_specs=[pl.BlockSpec((1, T, D), lambda b, q, lens: (b, 0, 0))]
                 + [_weight_spec(w.shape) for w in weights],
        out_specs=pl.BlockSpec((1, tq, D), lambda b, q, lens: (b, q, 0)),
        # lane-dense K/V scratch (no padded 64-wide per-head tiles)
        scratch_shapes=[pltpu.VMEM((T, n_head * d_k), jnp.bfloat16),
                        pltpu.VMEM((T, n_head * d_v), jnp.bfloat16)],
    )
    return pl.pallas_call(
        kern,
        out_shape=jax.ShapeDtypeStruct((N, T, D), jnp.bfloat16),
        grid_spec=grid_spec,
        compiler_params=pltpu.CompilerParams(
            # batch is megacore-parallel; the query-tile axis stays sequential so
            # the K/V scratch written at qi == 0 is valid for every later tile.
            dimension_semantics=("parallel", "arbitrary"),
            vmem_limit_bytes=48 * 1024 * 1024),
    )(lengths, x, *weights)


# ----------------------------------------------------------------------------
# Encoder glue (PE, parameter setup, layer loop)
# ----------------------------------------------------------------------------
def positional_encoding(max_len, d_model):
    pos = np.arange(max_len, dtype=np.float32)[:, None]
    div = np.exp(np.arange(0, d_model, 2, dtype=np.float32) * -(np.log(10000.0) / d_model))
    pe = np.zeros((max_len, d_model), dtype=np.float32)
    pe[:, 0::2] = np.sin(pos * div)
    pe[:, 1::2] = np.cos(pos * div)
    return jnp.asarray(pe)


def init_params(key, d_input, d_model, d_inner, n_head, d_k, d_v, n_layers, pe_maxlen):
    def lin(k, fan_in, fan_out):
        kw, kb = jax.random.split(k)
        w = (jax.random.normal(kw, (fan_in, fan_out), jnp.float32) * 0.05).astype(jnp.bfloat16)
        b = jax.random.normal(kb, (1, fan_out), jnp.float32) * 0.05
        return w, b

    def ln_params():
        return jnp.ones((1, d_model), jnp.float32), jnp.zeros((1, d_model), jnp.float32)

    keys = jax.random.split(key, 1 + n_layers)
    w_in, b_in = lin(keys[0], d_input, d_model)
    g_in, bb_in = ln_params()
    params = {
        "w_in": w_in, "b_in": b_in, "g_in": g_in, "bb_in": bb_in,
        "pe": positional_encoding(pe_maxlen, d_model),
        "layers": [],
    }
    for l in range(n_layers):
        lk = jax.random.split(keys[1 + l], 6)
        wq, bq = lin(lk[0], d_model, n_head * d_k)
        wk, bk = lin(lk[1], d_model, n_head * d_k)
        wv, bv = lin(lk[2], d_model, n_head * d_v)
        wfc, bfc = lin(lk[3], n_head * d_v, d_model)      # 2-D: single deep output proj
        w1, b1 = lin(lk[4], d_model, d_inner)
        w2, b2 = lin(lk[5], d_inner, d_model)
        g1, b1n = ln_params()
        g2, b2n = ln_params()
        params["layers"].append({
            "wq": wq, "bq": bq, "wk": wk, "bk": bk, "wv": wv, "bv": bv,
            "wfc": wfc, "bfc": bfc,
            "g1": g1, "b1n": b1n,
            "w1": w1, "b1": b1, "w2": w2, "b2": b2,
            "g2": g2, "b2n": b2n,
        })
    return params


def encoder_forward(params, padded_input, input_lengths, *, n_head, d_k, d_v, tq):
    N, T, _ = padded_input.shape
    assert T % tq == 0, "T must be a multiple of the query tile size"
    lengths = input_lengths.astype(jnp.int32)
    pe = params["pe"][:T]
    # dropout layers are identity (eval mode)
    x = inproj_pallas(padded_input.astype(jnp.bfloat16), params["w_in"],
                      params["b_in"], params["g_in"], params["bb_in"], pe, tq=tq)
    for lp in params["layers"]:
        x = encoder_layer_pallas(x, lengths, lp, n_head=n_head, d_k=d_k, d_v=d_v, tq=tq)
    return x


# ----------------------------------------------------------------------------
# pure-JAX reference (same math & same bf16 cast points, no Pallas)
# ----------------------------------------------------------------------------
def reference_forward(params, padded_input, input_lengths, *, n_head, d_k, d_v):
    f32, bf = jnp.float32, jnp.bfloat16
    N, T, _ = padded_input.shape
    lengths = input_lengths.astype(jnp.int32)
    npm = (jnp.arange(T)[None, :] < lengths[:, None]).astype(f32)[..., None]      # (N,T,1)
    key_pad = jnp.arange(T)[None, :] >= lengths[:, None]                          # (N,T)
    pe = params["pe"][:T]

    xin = padded_input.astype(bf)
    y = jnp.einsum("ntd,df->ntf", xin, params["w_in"],
                   preferred_element_type=f32) + params["b_in"]
    x = (_layernorm(y, params["g_in"], params["bb_in"]) + pe[None]).astype(bf)

    inv_temp = 1.0 / float(np.sqrt(d_k))
    for lp in params["layers"]:
        x32 = x.astype(f32)
        q = jnp.einsum("ntd,df->ntf", x, lp["wq"], preferred_element_type=f32) + lp["bq"]
        k = jnp.einsum("ntd,df->ntf", x, lp["wk"], preferred_element_type=f32) + lp["bk"]
        v = jnp.einsum("ntd,df->ntf", x, lp["wv"], preferred_element_type=f32) + lp["bv"]
        q = q.reshape(N, T, n_head, d_k).astype(bf)
        k = k.reshape(N, T, n_head, d_k).astype(bf)
        v = v.reshape(N, T, n_head, d_v).astype(bf)
        s = jnp.einsum("nqhd,nkhd->nhqk", q, k, preferred_element_type=f32) * inv_temp
        s = jnp.where(key_pad[:, None, None, :], NEG_INF, s)
        p = jax.nn.softmax(s, axis=-1)
        ctx = jnp.einsum("nhqk,nkhd->nqhd", p.astype(bf), v, preferred_element_type=f32)
        ctx = ctx.reshape(N, T, n_head * d_v)
        out = jnp.einsum("ntd,df->ntf", ctx.astype(bf), lp["wfc"],
                         preferred_element_type=f32) + lp["bfc"]
        attn = _layernorm(out + x32, lp["g1"], lp["b1n"]) * npm
        a_bf = attn.astype(bf)
        h1 = jnp.maximum(jnp.einsum("ntd,df->ntf", a_bf, lp["w1"],
                                    preferred_element_type=f32) + lp["b1"], 0.0)
        yy = jnp.einsum("ntd,df->ntf", h1.astype(bf), lp["w2"],
                        preferred_element_type=f32) + lp["b2"]
        x = (_layernorm(yy + attn, lp["g2"], lp["b2n"]) * npm).astype(bf)
    return x.astype(f32)


# ----------------------------------------------------------------------------
if __name__ == "__main__":
    # small shapes consistent with the module (realistic ASR would be
    # d_input=320, d_model=512, d_inner=2048, n_head=8, d_k=d_v=64, T~1024,
    # tq=256 on v5e/v6e, tq=128 on v7x)
    N, T = 2, 32
    d_input, d_model, d_inner = 16, 32, 64
    n_head, d_k, d_v = 2, 16, 16
    n_layers, pe_maxlen = 2, 64
    tq = 16                      # query-tile size (multiple of 16 for bf16 sublanes)

    key = jax.random.PRNGKey(0)
    kx, kp = jax.random.split(key)
    padded_input = jax.random.normal(kx, (N, T, d_input), jnp.float32)
    input_lengths = jnp.array([32, 19], jnp.int32)

    params = init_params(kp, d_input, d_model, d_inner, n_head, d_k, d_v,
                         n_layers, pe_maxlen)

    enc_out = encoder_forward(params, padded_input, input_lengths,
                              n_head=n_head, d_k=d_k, d_v=d_v, tq=tq)
    enc_out = jax.block_until_ready(enc_out)

    ref = reference_forward(params, padded_input, input_lengths,
                            n_head=n_head, d_k=d_k, d_v=d_v)

    assert enc_out.shape == (N, T, d_model)
    out32 = enc_out.astype(jnp.float32)
    assert bool(jnp.all(jnp.isfinite(out32)))
    assert bool(jnp.allclose(out32, ref, rtol=2e-2, atol=2e-2)), "mismatch vs reference"

    print("KERNEL_OK")
</pallas_src>

<mosaic_0001>
module attributes {stable_mosaic.version = 11 : i64} {
  func.func @_probe_kernel(%arg0: i32, %arg1: memref<8x128xf32, #tpu.memory_space<vmem>>, %arg2: memref<8x128xf32, #tpu.memory_space<vmem>>) attributes {dimension_semantics = [#tpu.dimension_semantics<arbitrary>], iteration_bounds = array<i64: 1>, scalar_prefetch = 0 : i64, scratch_operands = 0 : i64, tpu.core_type = #tpu.core_type<tc>, window_params = [{pipeline_mode = #tpu.pipeline_mode<synchronous>, transform_indices = @transform_0, window_bounds = array<i64: 8, 128>}, {pipeline_mode = #tpu.pipeline_mode<synchronous>, transform_indices = @transform_1, window_bounds = array<i64: 8, 128>}]} {
    %c0 = arith.constant 0 : index
    %c0_0 = arith.constant 0 : index
    %0 = vector.load %arg1[%c0, %c0_0] : memref<8x128xf32, #tpu.memory_space<vmem>>, vector<8x128xf32>
    %cst = arith.constant 1.000000e+00 : f32
    %1 = vector.broadcast %cst : f32 to vector<8x128xf32>
    %2 = arith.addf %0, %1 : vector<8x128xf32>
    %c0_1 = arith.constant 0 : index
    %c0_2 = arith.constant 0 : index
    %3 = vector.load %arg2[%c0_1, %c0_2] : memref<8x128xf32, #tpu.memory_space<vmem>>, vector<8x128xf32>
    tpu.vector_store %arg2[%c0_1, %c0_2], %2 {strides = array<i32>} : memref<8x128xf32, #tpu.memory_space<vmem>>, vector<8x128xf32>,
    return
  }
  func.func @transform_0(%arg0: i32) -> (i32, i32) {
    %c0_i32 = arith.constant 0 : i32
    %c0_i32_0 = arith.constant 0 : i32
    %c0_i32_1 = arith.constant 0 : i32
    return %c0_i32, %c0_i32_0 : i32, i32
  }
  func.func @transform_1(%arg0: i32) -> (i32, i32) {
    %c0_i32 = arith.constant 0 : i32
    %c0_i32_0 = arith.constant 0 : i32
    %c0_i32_1 = arith.constant 0 : i32
    return %c0_i32, %c0_i32_0 : i32, i32
  }
}

module attributes {stable_mosaic.version = 11 : i64} {
  func.func @inproj_kernel(%arg0: i32, %arg1: i32, %arg2: memref<1x16x16xbf16, #tpu.memory_space<vmem>>, %arg3: memref<16x32xbf16, #tpu.memory_space<vmem>>, %arg4: memref<1x32xf32, #tpu.memory_space<vmem>>, %arg5: memref<1x32xf32, #tpu.memory_space<vmem>>, %arg6: memref<1x32xf32, #tpu.memory_space<vmem>>, %arg7: memref<16x32xf32, #tpu.memory_space<vmem>>, %arg8: memref<1x16x32xbf16, #tpu.memory_space<vmem>>) attributes {dimension_semantics = [#tpu.dimension_semantics<parallel>, #tpu.dimension_semantics<parallel>], iteration_bounds = array<i64: 2, 2>, scalar_prefetch = 0 : i64, scratch_operands = 0 : i64, tpu.core_type = #tpu.core_type<tc>, window_params = [{transform_indices = @transform_0, window_bounds = array<i64: 1, 16, 16>}, {pipeline_mode = #tpu.pipeline_mode<synchronous>, transform_indices = @transform_1, window_bounds = array<i64: 16, 32>}, {pipeline_mode = #tpu.pipeline_mode<synchronous>, transform_indices = @transform_2, window_bounds = array<i64: 1, 32>}, {pipeline_mode = #tpu.pipeline_mode<synchronous>, transform_indices = @transform_3, window_bounds = array<i64: 1, 32>}, {pipeline_mode = #tpu.pipeline_mode<synchronous>, transform_indices = @transform_4, window_bounds = array<i64: 1, 32>}, {transform_indices = @transform_5, window_bounds = array<i64: 16, 32>}, {transform_indices = @transform_6, window_bounds = array<i64: 1, 16, 32>}]} {
    %c0 = arith.constant 0 : index
    %c0_0 = arith.constant 0 : index
    %c0_1 = arith.constant 0 : index
    %0 = vector.load %arg2[%c0, %c0_0, %c0_1] : memref<1x16x16xbf16, #tpu.memory_space<vmem>>, vector<1x16x16xbf16>
    %1 = vector.shape_cast %0 : vector<1x16x16xbf16> to vector<16x16xbf16>
    %c0_2 = arith.constant 0 : index
    %c0_3 = arith.constant 0 : index
    %2 = vector.load %arg3[%c0_2, %c0_3] : memref<16x32xbf16, #tpu.memory_space<vmem>>, vector<16x32xbf16>
    %cst = arith.constant dense<0.000000e+00> : vector<16x32xf32>
    %3 = tpu.matmul %1, %2, %cst {dimension_numbers = #tpu.dot_dimension_numbers<[1], [0], [0], [1], [0, 0, 1, 1], [], []>} : vector<16x16xbf16>, vector<16x32xbf16>, vector<16x32xf32> -> vector<16x32xf32>
    %c0_4 = arith.constant 0 : index
    %c0_5 = arith.constant 0 : index
    %4 = vector.load %arg4[%c0_4, %c0_5] : memref<1x32xf32, #tpu.memory_space<vmem>>, vector<1x32xf32>
    %5 = vector.broadcast %4 : vector<1x32xf32> to vector<16x32xf32>
    %6 = arith.addf %3, %5 : vector<16x32xf32>
    %c0_6 = arith.constant 0 : index
    %c0_7 = arith.constant 0 : index
    %7 = vector.load %arg5[%c0_6, %c0_7] : memref<1x32xf32, #tpu.memory_space<vmem>>, vector<1x32xf32>
    %c0_8 = arith.constant 0 : index
    %c0_9 = arith.constant 0 : index
    %8 = vector.load %arg6[%c0_8, %c0_9] : memref<1x32xf32, #tpu.memory_space<vmem>>, vector<1x32xf32>
    %cst_10 = arith.constant dense<0.000000e+00> : vector<16xf32>
    %9 = vector.multi_reduction <add>, %6, %cst_10 [1] : vector<16x32xf32> to vector<16xf32>
    %10 = vector.shape_cast %9 : vector<16xf32> to vector<16x1xf32>
    %cst_11 = arith.constant 3.200000e+01 : f32
    %11 = vector.broadcast %cst_11 : f32 to vector<16x1xf32>
    %12 = arith.divf %10, %11 : vector<16x1xf32>
    %13 = vector.broadcast %12 : vector<16x1xf32> to vector<16x32xf32>
    %14 = arith.subf %6, %13 : vector<16x32xf32>
    %15 = arith.mulf %14, %14 : vector<16x32xf32>
    %cst_12 = arith.constant dense<0.000000e+00> : vector<16xf32>
    %16 = vector.multi_reduction <add>, %15, %cst_12 [1] : vector<16x32xf32> to vector<16xf32>
    %17 = vector.shape_cast %16 : vector<16xf32> to vector<16x1xf32>
    %cst_13 = arith.constant 3.200000e+01 : f32
    %18 = vector.broadcast %cst_13 : f32 to vector<16x1xf32>
    %19 = arith.divf %17, %18 : vector<16x1xf32>
    %20 = vector.broadcast %12 : vector<16x1xf32> to vector<16x32xf32>
    %21 = arith.subf %6, %20 : vector<16x32xf32>
    %cst_14 = arith.constant 9.99999974E-6 : f32
    %22 = vector.broadcast %cst_14 : f32 to vector<16x1xf32>
    %23 = arith.addf %19, %22 : vector<16x1xf32>
    %24 = math.rsqrt %23 : vector<16x1xf32>
    %25 = vector.broadcast %24 : vector<16x1xf32> to vector<16x32xf32>
    %26 = arith.mulf %21, %25 : vector<16x32xf32>
    %27 = vector.broadcast %7 : vector<1x32xf32> to vector<16x32xf32>
    %28 = arith.mulf %26, %27 : vector<16x32xf32>
    %29 = vector.broadcast %8 : vector<1x32xf32> to vector<16x32xf32>
    %30 = arith.addf %28, %29 : vector<16x32xf32>
    %c0_15 = arith.constant 0 : index
    %c0_16 = arith.constant 0 : index
    %31 = vector.load %arg7[%c0_15, %c0_16] : memref<16x32xf32, #tpu.memory_space<vmem>>, vector<16x32xf32>
    %32 = arith.addf %30, %31 : vector<16x32xf32>
    %33 = arith.truncf %32 : vector<16x32xf32> to vector<16x32xbf16>
    %c0_17 = arith.constant 0 : index
    %c0_18 = arith.constant 0 : index
    %c0_19 = arith.constant 0 : index
    %34 = vector.load %arg8[%c0_17, %c0_18, %c0_19] : memref<1x16x32xbf16, #tpu.memory_space<vmem>>, vector<1x16x32xbf16>
    %35 = vector.shape_cast %34 : vector<1x16x32xbf16> to vector<16x32xbf16>
    %36 = vector.shape_cast %33 : vector<16x32xbf16> to vector<1x16x32xbf16>
    tpu.vector_store %arg8[%c0_17, %c0_18, %c0_19], %36 {strides = array<i32>} : memref<1x16x32xbf16, #tpu.memory_space<vmem>>, vector<1x16x32xbf16>,
    return
  }
  func.func @transform_0(%arg0: i32, %arg1: i32) -> (i32, i32, i32) {
    %c0_i32 = arith.constant 0 : i32
    %c0_i32_0 = arith.constant 0 : i32
    return %arg0, %arg1, %c0_i32 : i32, i32, i32
  }
  func.func @transform_1(%arg0: i32, %arg1: i32) -> (i32, i32) {
    %c0_i32 = arith.constant 0 : i32
    %c0_i32_0 = arith.constant 0 : i32
    %c0_i32_1 = arith.constant 0 : i32
    return %c0_i32, %c0_i32_0 : i32, i32
  }
  func.func @transform_2(%arg0: i32, %arg1: i32) -> (i32, i32) {
    %c0_i32 = arith.constant 0 : i32
    %c0_i32_0 = arith.constant 0 : i32
    %c0_i32_1 = arith.constant 0 : i32
    return %c0_i32, %c0_i32_0 : i32, i32
  }
  func.func @transform_3(%arg0: i32, %arg1: i32) -> (i32, i32) {
    %c0_i32 = arith.constant 0 : i32
    %c0_i32_0 = arith.constant 0 : i32
    %c0_i32_1 = arith.constant 0 : i32
    return %c0_i32, %c0_i32_0 : i32, i32
  }
  func.func @transform_4(%arg0: i32, %arg1: i32) -> (i32, i32) {
    %c0_i32 = arith.constant 0 : i32
    %c0_i32_0 = arith.constant 0 : i32
    %c0_i32_1 = arith.constant 0 : i32
    return %c0_i32, %c0_i32_0 : i32, i32
  }
  func.func @transform_5(%arg0: i32, %arg1: i32) -> (i32, i32) {
    %c0_i32 = arith.constant 0 : i32
    %c0_i32_0 = arith.constant 0 : i32
    return %arg1, %c0_i32 : i32, i32
  }
  func.func @transform_6(%arg0: i32, %arg1: i32) -> (i32, i32, i32) {
    %c0_i32 = arith.constant 0 : i32
    %c0_i32_0 = arith.constant 0 : i32
    return %arg0, %arg1, %c0_i32 : i32, i32, i32
  }
}

</mosaic_0001>

<llo_original>
// kernel: tpu_custom_call.1
$region0: #{tpu_custom_call.1}
  #allocation0 [shape = 'u32[]', space=smem, size = 0x4, offset = 0x4, fixed_abs, tag = 'smem constant byte address 0x4 - core index']
  #allocation1 [shape = 'u32[72,128]{1,0:T(1,128)}', space=vmem, size = 0x9000, scoped, tag = 'internal scratch']
  %s0 = inlined_call_operand.hbm [shape: f32[8,128], index: 0, kind: input, shape index: {}]
  %s1 = inlined_call_operand.hbm [shape: f32[8,128], index: 1, kind: output, shape index: {}]
  %s2 = sld [smem:[#allocation0]]
  $region18: #{tpu_custom_call.1} parent=0
    _
  %s4 = ssub.s32 1, %s2
  %s5 = scalar_select 0, %s4, %s2
  $region1: #{tpu_custom_call.1} parent=0
    #allocation2 [shape = 'u8[4096]{0}', space=vmem, size = 0x1000, scoped, tag = 'input window, operand 0, single buffered']
    #allocation3 [shape = 's32[1]{0}', space=sflag, size = 0x4, scoped, tag = 'scoped memory for tpu_custom_call.1']
    #allocation4 [shape = 's32[1]{0}', space=sflag, size = 0x4, scoped, tag = 'scoped memory for tpu_custom_call.1']
    #allocation5 [shape = 'u8[4096]{0}', space=vmem, size = 0x1000, scoped, tag = 'output window, operand 0, single buffered']
    %6 = vsyncpa [#allocation3], 0
    %7 = vsyncpa [#allocation4], 0
    // Predicated region
    $region2: #{tpu_custom_call.1} parent=1 // pred_check
      _
    $region3: #{tpu_custom_call.1} parent=1 // pred_check_branch
      %9 = sbr.rel (0) target = $region5
    $region4: #{tpu_custom_call.1} parent=1 // pred_region
      %11 = vsyncadd [#allocation3], 0
      %s13 = sshll.u32 %s0, 4
      %s14 = int_to_ptr.hbm [resolvable:$true] %s13
      %s15 = sshll.u32 [#allocation2], 4
      %s16 = int_to_ptr.vmem [resolvable:$true] %s15
      %18 = dma.hbm_to_vmem [thread:$0]  %s14, 128, %s16, [#allocation3]
    $region5: #{tpu_custom_call.1} parent=1 // pred_fallthru
      _
    // Predicated region
    $region6: #{tpu_custom_call.1} parent=1 // pred_check
      _
    $region7: #{tpu_custom_call.1} parent=1 // pred_check_branch
      %20 = sbr.rel (0) target = $region9
    $region8: #{tpu_custom_call.1} parent=1 // pred_region
      %22 = dma.done [#allocation3], 128
    $region9: #{tpu_custom_call.1} parent=1 // pred_fallthru
      _
    %v23 = vld [vmem:[#allocation2] sm:$0xff]
    %v24 = vadd.f32 %v23, 1.0
    %25 = vst [vmem:[#allocation5] sm:$0xff] %v24
    // Predicated region
    $region10: #{tpu_custom_call.1} parent=1 // pred_check
      _
    $region11: #{tpu_custom_call.1} parent=1 // pred_check_branch
      %27 = sbr.rel (0) target = $region13
    $region12: #{tpu_custom_call.1} parent=1 // pred_region
      %29 = vsyncadd [#allocation4], 0
      %s31 = sshll.u32 [#allocation5], 4
      %s32 = int_to_ptr.vmem [resolvable:$true] %s31
      %s33 = sshll.u32 %s1, 4
      %s34 = int_to_ptr.hbm [resolvable:$true] %s33
      %36 = dma.vmem_to_hbm [thread:$0]  %s32, 128, %s34, [#allocation4]
    $region13: #{tpu_custom_call.1} parent=1 // pred_fallthru
      _
    // Predicated region
    $region14: #{tpu_custom_call.1} parent=1 // pred_check
      _
    $region15: #{tpu_custom_call.1} parent=1 // pred_check_branch
      %38 = sbr.rel (0) target = $region17
    $region16: #{tpu_custom_call.1} parent=1 // pred_region
      %40 = dma.done [#allocation4], 128
    $region17: #{tpu_custom_call.1} parent=1 // pred_fallthru
      _
    %41 = vsyncpa [#allocation3], 1
    %42 = vsyncpa [#allocation4], 1

// kernel: tpu_custom_call.1
$region0: #{tpu_custom_call.1}
  #allocation0 [shape = 'u32[]', space=smem, size = 0x4, offset = 0x4, fixed_abs, tag = 'smem constant byte address 0x4 - core index']
  #allocation1 [shape = 'u32[72,128]{1,0:T(1,128)}', space=vmem, size = 0x9000, scoped, tag = 'internal scratch']
  %s0 = inlined_call_operand.vmem [shape: bf16[2,32,16], index: 0, kind: input, shape index: {}]
  %s1 = inlined_call_operand.vmem [shape: bf16[16,32], index: 1, kind: input, shape index: {}]
  %s2 = inlined_call_operand.vmem [shape: f32[1,32], index: 2, kind: input, shape index: {}]
  %s3 = inlined_call_operand.vmem [shape: f32[1,32], index: 3, kind: input, shape index: {}]
  %s4 = inlined_call_operand.vmem [shape: f32[1,32], index: 4, kind: input, shape index: {}]
  %s5 = inlined_call_operand.vmem [shape: f32[32,32], index: 5, kind: input, shape index: {}]
  %s6 = inlined_call_operand.hbm [shape: bf16[2,32,32], index: 6, kind: output, shape index: {}]
  %s7 = sld [smem:[#allocation0]]
  $region57: #{tpu_custom_call.1} parent=0
    _
  %s9 = ssub.s32 1, %s7
  %s10 = scalar_select 0, %s9, %s7
  $region1: #{tpu_custom_call.1} parent=0
    #allocation2 [shape = 'u8[8192]{0}', space=vmem, size = 0x2000, scoped, tag = 'output window, operand 0']
    #allocation3 [shape = 's32[2]{0}', space=sflag, size = 0x8, scoped, tag = 'scoped memory for tpu_custom_call.1']
    %11 = vsyncpa [#allocation3], 0
    %s12 = scalar_lea.sflag [#allocation3], 1
    %13 = vsyncpa %s12, 0
    loop: start=0, step=1, limit=6
    $region2: #{tpu_custom_call.1} parent=1 // loop_pre_header
      _
    $region3: #{tpu_custom_call.1} parent=1 // loop_header
      %s15 = sphi 0, %s19
      %p16 = scmp.ge.s32.totalorder %s15, 6
      %s22 = sphi 0, %s34
      %s23 = sphi 0, %s30
      %s24 = sphi 0, %s22
      %s25 = sphi 0, %s23
      %s26 = sphi 0, %s24
      %s27 = sphi 0, %s25
      %s39 = sphi 0, %s41
      %s42 = sphi 0, %s39
      %s43 = sphi 0, %s42
      %s59 = sphi 0, %s43
      %s63 = sphi 0, %s63
      %s65 = sphi 0, %s63
      %s66 = sphi 0, %s65
      %s80 = sphi 0, %s66
      %s84 = sphi 0, %s84
      %s86 = sphi 0, %s84
      %s87 = sphi 0, %s86
      %s101 = sphi 0, %s87
      %s105 = sphi 0, %s105
      %s107 = sphi 0, %s105
      %s108 = sphi 0, %s107
      %s122 = sphi 0, %s108
      %s126 = sphi 0, %s126
      %s128 = sphi 0, %s126
      %s129 = sphi 0, %s128
      %s143 = sphi 0, %s129
      %s149 = sphi 0, %s151
      %s152 = sphi 0, %s149
      %s153 = sphi 0, %s152
      %s169 = sphi 0, %s153
      %s177 = sphi 0, %s179
      %s180 = sphi 0, %s177
      %s181 = sphi 0, %s180
      %s197 = sphi 0, %s181
    $region4: #{tpu_custom_call.1} parent=1 // loop_header_branch
      %18 = sbr.rel (%p16) target = $region8
    $region5: #{tpu_custom_call.1} parent=1 // loop_body
      %s20 = ssub.s32 %s15, 1
      %s21 = ssub.s32 %s15, 2
      %s28 = sadd.s32 1, %s23
      %p29 = scmp.ge.s32.totalorder %s28, 2
      %s30 = scalar_select %p29, 0, %s28
      %s31 = sadd.s32 1, %s22
      %s32 = scalar_select %p29, %s31, %s22
      %p33 = scmp.ge.s32.totalorder %s32, 2
      %s34 = scalar_select %p33, 0, %s32
      %s35 = ssub.s32 %s22, %s34
      %s36 = ssub.s32 %s23, %s30
      %s37 = sor.u32 %s35, %s36
      %p38 = scmp.eq.s32.totalorder %s37, 0
      %s40 = sadd.s32 %s39, 1
      %s41 = scalar_select %p38, %s39, %s40
      %p44 = pneg %p38
      %p45 = scmp.eq.s32.totalorder %s15, 3
      %p46 = por %p44, %p45
      %p47 = scmp.ne.s32.totalorder %s39, %s42
      %p48 = scmp.eq.s32.totalorder %s15, 0
      %p49 = por %p47, %p48
      %p50 = scmp.ne.s32.totalorder %s39, %s42
      %p51 = scmp.eq.s32.totalorder %s20, 3
      %p52 = por %p50, %p51
      %p53 = scmp.ne.s32.totalorder %s42, %s43
      %p54 = scmp.eq.s32.totalorder %s20, 0
      %p55 = por %p53, %p54
      %p56 = scmp.ne.s32.totalorder %s42, %s43
      %p57 = scmp.eq.s32.totalorder %s21, 3
      %p58 = por %p56, %p57
      %p60 = scmp.ne.s32.totalorder %s43, %s59
      %p61 = scmp.eq.s32.totalorder %s21, 0
      %p62 = por %p60, %p61
      %s64 = sadd.s32 %s63, 1
      %p67 = scmp.eq.s32.totalorder %s15, 3
      %p68 = scmp.ne.s32.totalorder %s63, %s65
      %p69 = scmp.eq.s32.totalorder %s15, 0
      %p70 = por %p68, %p69
      %p71 = scmp.ne.s32.totalorder %s63, %s65
      %p72 = scmp.eq.s32.totalorder %s20, 3
      %p73 = por %p71, %p72
      %p74 = scmp.ne.s32.totalorder %s65, %s66
      %p75 = scmp.eq.s32.totalorder %s20, 0
      %p76 = por %p74, %p75
      %p77 = scmp.ne.s32.totalorder %s65, %s66
      %p78 = scmp.eq.s32.totalorder %s21, 3
      %p79 = por %p77, %p78
      %p81 = scmp.ne.s32.totalorder %s66, %s80
      %p82 = scmp.eq.s32.totalorder %s21, 0
      %p83 = por %p81, %p82
      %s85 = sadd.s32 %s84, 1
      %p88 = scmp.eq.s32.totalorder %s15, 3
      %p89 = scmp.ne.s32.totalorder %s84, %s86
      %p90 = scmp.eq.s32.totalorder %s15, 0
      %p91 = por %p89, %p90
      %p92 = scmp.ne.s32.totalorder %s84, %s86
      %p93 = scmp.eq.s32.totalorder %s20, 3
      %p94 = por %p92, %p93
      %p95 = scmp.ne.s32.totalorder %s86, %s87
      %p96 = scmp.eq.s32.totalorder %s20, 0
      %p97 = por %p95, %p96
      %p98 = scmp.ne.s32.totalorder %s86, %s87
      %p99 = scmp.eq.s32.totalorder %s21, 3
      %p100 = por %p98, %p99
      %p102 = scmp.ne.s32.totalorder %s87, %s101
      %p103 = scmp.eq.s32.totalorder %s21, 0
      %p104 = por %p102, %p103
      %s106 = sadd.s32 %s105, 1
      %p109 = scmp.eq.s32.totalorder %s15, 3
      %p110 = scmp.ne.s32.totalorder %s105, %s107
      %p111 = scmp.eq.s32.totalorder %s15, 0
      %p112 = por %p110, %p111
      %p113 = scmp.ne.s32.totalorder %s105, %s107
      %p114 = scmp.eq.s32.totalorder %s20, 3
      %p115 = por %p113, %p114
      %p116 = scmp.ne.s32.totalorder %s107, %s108
      %p117 = scmp.eq.s32.totalorder %s20, 0
      %p118 = por %p116, %p117
      %p119 = scmp.ne.s32.totalorder %s107, %s108
      %p120 = scmp.eq.s32.totalorder %s21, 3
      %p121 = por %p119, %p120
      %p123 = scmp.ne.s32.totalorder %s108, %s122
      %p124 = scmp.eq.s32.totalorder %s21, 0
      %p125 = por %p123, %p124
      %s127 = sadd.s32 %s126, 1
      %p130 = scmp.eq.s32.totalorder %s15, 3
      %p131 = scmp.ne.s32.totalorder %s126, %s128
      %p132 = scmp.eq.s32.totalorder %s15, 0
      %p133 = por %p131, %p132
      %p134 = scmp.ne.s32.totalorder %s126, %s128
      %p135 = scmp.eq.s32.totalorder %s20, 3
      %p136 = por %p134, %p135
      %p137 = scmp.ne.s32.totalorder %s128, %s129
      %p138 = scmp.eq.s32.totalorder %s20, 0
      %p139 = por %p137, %p138
      %p140 = scmp.ne.s32.totalorder %s128, %s129
      %p141 = scmp.eq.s32.totalorder %s21, 3
      %p142 = por %p140, %p141
      %p144 = scmp.ne.s32.totalorder %s129, %s143
      %p145 = scmp.eq.s32.totalorder %s21, 0
      %p146 = por %p144, %p145
      %s147 = ssub.s32 %s23, %s30
      %p148 = scmp.eq.s32.totalorder %s147, 0
      %s150 = sadd.s32 %s149, 1
      %s151 = scalar_select %p148, %s149, %s150
      %p154 = pneg %p148
      %p155 = scmp.eq.s32.totalorder %s15, 3
      %p156 = por %p154, %p155
      %p157 = scmp.ne.s32.totalorder %s149, %s152
      %p158 = scmp.eq.s32.totalorder %s15, 0
      %p159 = por %p157, %p158
      %p160 = scmp.ne.s32.totalorder %s149, %s152
      %p161 = scmp.eq.s32.totalorder %s20, 3
      %p162 = por %p160, %p161
      %p163 = scmp.ne.s32.totalorder %s152, %s153
      %p164 = scmp.eq.s32.totalorder %s20, 0
      %p165 = por %p163, %p164
      %p166 = scmp.ne.s32.totalorder %s152, %s153
      %p167 = scmp.eq.s32.totalorder %s21, 3
      %p168 = por %p166, %p167
      %p170 = scmp.ne.s32.totalorder %s153, %s169
      %p171 = scmp.eq.s32.totalorder %s21, 0
      %p172 = por %p170, %p171
      %s173 = ssub.s32 %s22, %s34
      %s174 = ssub.s32 %s23, %s30
      %s175 = sor.u32 %s173, %s174
      %p176 = scmp.eq.s32.totalorder %s175, 0
      %s178 = sadd.s32 %s177, 1
      %s179 = scalar_select %p176, %s177, %s178
      %p182 = pneg %p176
      %p183 = scmp.eq.s32.totalorder %s15, 3
      %p184 = por %p182, %p183
      %p185 = scmp.ne.s32.totalorder %s177, %s180
      %p186 = scmp.eq.s32.totalorder %s15, 0
      %p187 = por %p185, %p186
      %p188 = scmp.ne.s32.totalorder %s177, %s180
      %p189 = scmp.eq.s32.totalorder %s20, 3
      %p190 = por %p188, %p189
      %p191 = scmp.ne.s32.totalorder %s180, %s181
      %p192 = scmp.eq.s32.totalorder %s20, 0
      %p193 = por %p191, %p192
      %p194 = scmp.ne.s32.totalorder %s180, %s181
      %p195 = scmp.eq.s32.totalorder %s21, 3
      %p196 = por %p194, %p195
      %p198 = scmp.ne.s32.totalorder %s181, %s197
      %p199 = scmp.eq.s32.totalorder %s21, 0
      %p200 = por %p198, %p199
      %p201 = scmp.le.s32.totalorder 1, %s15
      %p202 = scmp.lt.s32.totalorder %s15, 5
      %p203 = pnand %p201, %p202
      %p204 = pneg %p203
      // Predicated region
      $region9: #{tpu_custom_call.1} parent=5 // pred_check
        _
      $region10: #{tpu_custom_call.1} parent=5 // pred_check_branch
        %206 = sbr.rel (%p203) target = $region12
      $region11: #{tpu_custom_call.1} parent=5 // pred_region
        %s207 = ssub.s32 %s15, 1
        // Predicated region
        $region13: #{tpu_custom_call.1} parent=11 // pred_check
          %p208 = pneg %p76
        $region14: #{tpu_custom_call.1} parent=11 // pred_check_branch
          %210 = sbr.rel (%p208) target = $region16
        $region15: #{tpu_custom_call.1} parent=11 // pred_region
          _
        $region16: #{tpu_custom_call.1} parent=11 // pred_fallthru
          _
        // Predicated region
        $region17: #{tpu_custom_call.1} parent=11 // pred_check
          %p211 = pneg %p97
        $region18: #{tpu_custom_call.1} parent=11 // pred_check_branch
          %213 = sbr.rel (%p211) target = $region20
        $region19: #{tpu_custom_call.1} parent=11 // pred_region
          _
        $region20: #{tpu_custom_call.1} parent=11 // pred_fallthru
          _
        // Predicated region
        $region21: #{tpu_custom_call.1} parent=11 // pred_check
          %p214 = pneg %p118
        $region22: #{tpu_custom_call.1} parent=11 // pred_check_branch
          %216 = sbr.rel (%p214) target = $region24
        $region23: #{tpu_custom_call.1} parent=11 // pred_region
          _
        $region24: #{tpu_custom_call.1} parent=11 // pred_fallthru
          _
        // Predicated region
        $region25: #{tpu_custom_call.1} parent=11 // pred_check
          %p217 = pneg %p139
        $region26: #{tpu_custom_call.1} parent=11 // pred_check_branch
          %219 = sbr.rel (%p217) target = $region28
        $region27: #{tpu_custom_call.1} parent=11 // pred_region
          _
        $region28: #{tpu_custom_call.1} parent=11 // pred_fallthru
          _
      $region12: #{tpu_custom_call.1} parent=5 // pred_fallthru
        _
      %p220 = scmp.lt.s32.totalorder %s15, 4
      // Predicated region
      $region29: #{tpu_custom_call.1} parent=5 // pred_check
        %p221 = pneg %p220
      $region30: #{tpu_custom_call.1} parent=5 // pred_check_branch
        %223 = sbr.rel (%p221) target = $region32
      $region31: #{tpu_custom_call.1} parent=5 // pred_region
        // Predicated region
        $region33: #{tpu_custom_call.1} parent=31 // pred_check
          %p224 = pneg %p49
        $region34: #{tpu_custom_call.1} parent=31 // pred_check_branch
          %226 = sbr.rel (%p224) target = $region36
        $region35: #{tpu_custom_call.1} parent=31 // pred_region
          %s227 = smul.u32 2, %s23
          %p228 = scmp.lt.s32.totalorder %s22, 1
          %s229 = scalar_select %p228, %s22, 1
          %p230 = scmp.lt.s32.totalorder %s227, 3
          %s231 = scalar_select %p230, %s227, 3
          %s232 = smul.addr %s229, 4
          %s233 = sadd.s32 %s231, %s232
          %s234 = smul.addr %s233, 4
          %s235 = scalar_lea.vmem %s0, %s234
          %s236 = smul.u32 2, %s23
        $region36: #{tpu_custom_call.1} parent=31 // pred_fallthru
          _
        // Predicated region
        $region37: #{tpu_custom_call.1} parent=31 // pred_check
          %p237 = pneg %p159
        $region38: #{tpu_custom_call.1} parent=31 // pred_check_branch
          %239 = sbr.rel (%p237) target = $region40
        $region39: #{tpu_custom_call.1} parent=31 // pred_region
          %s240 = smul.u32 2, %s23
          %p241 = scmp.lt.s32.totalorder %s240, 3
          %s242 = scalar_select %p241, %s240, 3
          %s243 = smul.addr %s242, 8
          %s244 = scalar_lea.vmem %s5, %s243
          %s245 = smul.u32 2, %s23
        $region40: #{tpu_custom_call.1} parent=31 // pred_fallthru
          _
      $region32: #{tpu_custom_call.1} parent=5 // pred_fallthru
        _
      %p246 = scmp.le.s32.totalorder 1, %s15
      %p247 = scmp.lt.s32.totalorder %s15, 5
      %p248 = pnand %p246, %p247
      %p249 = pneg %p248
      // Predicated region
      $region41: #{tpu_custom_call.1} parent=5 // pred_check
        _
      $region42: #{tpu_custom_call.1} parent=5 // pred_check_branch
        %251 = sbr.rel (%p248) target = $region44
      $region43: #{tpu_custom_call.1} parent=5 // pred_region
        %s252 = ssub.s32 %s15, 1
        %s253 = smul.u32 2, %s25
        %p254 = scmp.lt.s32.totalorder %s24, 1
        %s255 = scalar_select %p254, %s24, 1
        %p256 = scmp.lt.s32.totalorder %s253, 3
        %s257 = scalar_select %p256, %s253, 3
        %s258 = smul.addr %s255, 4
        %s259 = sadd.s32 %s257, %s258
        %s260 = smul.addr %s259, 4
        %s261 = scalar_lea.vmem %s0, %s260
        %p262 = pneg %p55
        %p263 = pneg %p52
        %p264 = pneg %p76
        %p265 = pneg %p73
        %p266 = pneg %p97
        %p267 = pneg %p94
        %p268 = pneg %p118
        %p269 = pneg %p115
        %p270 = pneg %p139
        %p271 = pneg %p136
        %s272 = smul.u32 2, %s25
        %p273 = scmp.lt.s32.totalorder %s272, 3
        %s274 = scalar_select %p273, %s272, 3
        %s275 = smul.addr %s274, 8
        %s276 = scalar_lea.vmem %s5, %s275
        %p277 = pneg %p165
        %p278 = pneg %p162
        %p279 = pneg %p193
        %p280 = pneg %p190
        %s281 = sand.u32 %s180, 1
        %s282 = scalar_lea.sflag [#allocation3], %s281
        %s283 = sand.u32 %s180, 1
        %s284 = smul.addr %s283, 8
        %s285 = scalar_lea.vmem [#allocation2], %s284
        %s286 = smul.u32 2, %s25
        %p287 = scmp.lt.s32.totalorder %s24, 1
        %s288 = scalar_select %p287, %s24, 1
        %p289 = scmp.lt.s32.totalorder %s286, 3
        %s290 = scalar_select %p289, %s286, 3
        %s291 = smul.addr %s288, 4
        %s292 = sadd.s32 %s290, %s291
        %s293 = smul.addr %s292, 4
        %s294 = scalar_lea.vmem %s0, %s293
        %s295 = smul.u32 2, %s25
        %s296 = smul.u32 2, %s25
        %p297 = scmp.lt.s32.totalorder %s296, 3
        %s298 = scalar_select %p297, %s296, 3
        %s299 = smul.addr %s298, 8
        %s300 = scalar_lea.vmem %s5, %s299
        %s301 = smul.u32 2, %s25
        %s302 = smul.u32 2, %s25
        %v304 = vld [vmem:[%s294] sm:$0xf]
        %v305 = vld [vmem:[%s294 + $0x4] sm:$0xf]
        %v306 = vld [vmem:[%s1] sm:$0xf]
        %v307 = vld [vmem:[%s1 + $0x4] sm:$0xf]
        %v308 = vld [vmem:[%s2] sm:$0x1]
        %v310 = vperm.slane %v308, 0
        %v314 = vunpack.c.l.b16 %v304
        %v315 = vunpack.c.l.b16 %v305
        %v316 = vpack.c.b16 %v315, %v314
        %v319 = vunpack.c.l.b16 %v306
        %v320 = vunpack.c.l.b16 %v307
        %v321 = vpack.c.b16 %v320, %v319
        %vm323 = vcmask 130048
        %v325 = vsel %vm323, %v316, 0
        %327 = vmatpush.bf16.msra.mxu0 0
        %328 = vmatpush.bf16.msra.mxu0 0
        %329 = vmatpush.bf16.msra.mxu0 0
        %330 = vmatpush.bf16.msra.mxu0 0
        %331 = vmatpush.bf16.msra.mxu0 0
        %332 = vmatpush.bf16.msra.mxu0 0
        %333 = vmatpush.bf16.msra.mxu0 0
        %334 = vmatpush.bf16.msra.mxu0 %v321
        %335 = vmatmul.bf16.gmra.mxu0 %v325
        %v336 = vpop.f32.mrf.mxu0
        %v337 = vadd.f32 %v310, %v336
        %v338 = vpop.f32.mrf.mxu0
        %v339 = vadd.f32 %v310, %v338
        %340 = vdwg.mxu0
        %v341 = vld [vmem:[%s3] sm:$0x1]
        %v342 = vld [vmem:[%s4] sm:$0x1]
        %vm343 = vcmask 261120
        %v344 = vsel %vm343, %v337, 0.0
        %345 = vadd.xlane.f32.xlu0 %v344
        %v346 = vpop.xlane.xlu0 %345
        %v347 = vsel %vm343, %v339, 0.0
        %348 = vadd.xlane.f32.xlu0 %v347
        %v349 = vpop.xlane.xlu0 %348
        %v350 = vrcp.pop 32.0
        %v351 = vmul.f32 32.0, %v350
        %v352 = vsub.f32 1.0, %v351
        %v353 = vmul.f32 %v350, %v352
        %v354 = vadd.f32 %v350, %v353
        %vm355 = vweird.f32 %v350
        %v356 = vsel %vm355, %v350, %v354
        %v357 = vmul.f32 %v346, %v356
        %v358 = vmul.f32 %v349, %v356
        %v359 = vsub.f32 %v337, %v357
        %v360 = vsub.f32 %v339, %v358
        %v361 = vmul.f32 %v359, %v359
        %v362 = vmul.f32 %v360, %v360
        %v363 = vsel %vm343, %v361, 0.0
        %364 = vadd.xlane.f32.xlu0 %v363
        %v365 = vpop.xlane.xlu0 %364
        %v366 = vsel %vm343, %v362, 0.0
        %367 = vadd.xlane.f32.xlu0 %v366
        %v368 = vpop.xlane.xlu0 %367
        %v369 = vmul.f32 %v365, %v356
        %v370 = vmul.f32 %v368, %v356
        %v371 = vadd.f32 %v369, 1e-05
        %v372 = vadd.f32 %v370, 1e-05
        %v373 = vrsqrt.pop %v371
        %v374 = vmul.f32 %v373, %v371
        %v375 = vmul.f32 %v374, %v373
        %v376 = vmul.f32 0.5, %v375
        %v377 = vsub.f32 1.5, %v376
        %v378 = vmul.f32 %v373, %v377
        %vm379 = vweird.f32 %v371
        %vm380 = vweird.f32 %v373
        %vm381 = vmor %vm379, %vm380
        %v382 = vsel %vm381, %v373, %v378
        %v383 = vrsqrt.pop %v372
        %v384 = vmul.f32 %v383, %v372
        %v385 = vmul.f32 %v384, %v383
        %v386 = vmul.f32 0.5, %v385
        %v387 = vsub.f32 1.5, %v386
        %v388 = vmul.f32 %v383, %v387
        %vm389 = vweird.f32 %v372
        %vm390 = vweird.f32 %v383
        %vm391 = vmor %vm389, %vm390
        %v392 = vsel %vm391, %v383, %v388
        %v393 = vmul.f32 %v359, %v382
        %v394 = vmul.f32 %v360, %v392
        %v396 = vperm.slane %v341, 0
        %v398 = vmul.f32 %v393, %v396
        %v399 = vmul.f32 %v394, %v396
        %v401 = vperm.slane %v342, 0
        %v403 = vadd.f32 %v398, %v401
        %v404 = vadd.f32 %v399, %v401
        %v405 = vld [vmem:[%s300] sm:$0xff]
        %v406 = vld [vmem:[%s300 + $0x8] sm:$0xff]
        %v407 = vadd.f32 %v403, %v405
        %v408 = vadd.f32 %v404, %v406
        %v409 = vpack.c.bf16 %v407, %v407
        %v410 = vpack.c.bf16 %v408, %v408
        %vm411 = vcmask 257024
        %412 = vst.msk [vmem:[%s285] sm:$0xf] %vm411, %v409
        %413 = vst.msk [vmem:[%s285 + $0x4] sm:$0xf] %vm411, %v410
        %s414 = sand.u32 %s180, 1
        %s415 = scalar_lea.sflag [#allocation3], %s414
        %s416 = sand.u32 %s180, 1
        %s417 = smul.addr %s416, 8
        %s418 = scalar_lea.vmem [#allocation2], %s417
        // Predicated region
        $region45: #{tpu_custom_call.1} parent=43 // pred_check
          %p419 = pneg %p190
        $region46: #{tpu_custom_call.1} parent=43 // pred_check_branch
          %421 = sbr.rel (%p419) target = $region48
        $region47: #{tpu_custom_call.1} parent=43 // pred_region
          %s422 = smul.u32 2, %s25
          %424 = vsyncadd %s415, 0
          %s425 = smul.addr %s24, 4
          %s426 = sadd.s32 %s422, %s425
          %s427 = smul.addr %s426, 4
          %s428 = scalar_lea.hbm %s6, %s427
          %s429 = sshll.u32 %s418, 4
          %s430 = int_to_ptr.vmem [resolvable:$true] %s429
          %s431 = sshll.u32 %s428, 4
          %s432 = int_to_ptr.hbm [resolvable:$true] %s431
          %437 = dma.vmem_to_hbm [thread:$0]  %s430, 128, %s432, %s415, 64, 64, 4
        $region48: #{tpu_custom_call.1} parent=43 // pred_fallthru
          _
      $region44: #{tpu_custom_call.1} parent=5 // pred_fallthru
        _
      %p438 = scmp.le.s32.totalorder 2, %s15
      // Predicated region
      $region49: #{tpu_custom_call.1} parent=5 // pred_check
        %p439 = pneg %p438
      $region50: #{tpu_custom_call.1} parent=5 // pred_check_branch
        %441 = sbr.rel (%p439) target = $region52
      $region51: #{tpu_custom_call.1} parent=5 // pred_region
        %s442 = ssub.s32 %s15, 2
        // Predicated region
        $region53: #{tpu_custom_call.1} parent=51 // pred_check
          %p443 = pneg %p196
        $region54: #{tpu_custom_call.1} parent=51 // pred_check_branch
          %445 = sbr.rel (%p443) target = $region56
        $region55: #{tpu_custom_call.1} parent=51 // pred_region
          %s446 = sand.u32 %s181, 1
          %s447 = scalar_lea.sflag [#allocation3], %s446
          %s448 = sand.u32 %s181, 1
          %s449 = smul.addr %s448, 8
          %s450 = scalar_lea.vmem [#allocation2], %s449
          %452 = dma.done %s447, 128
        $region56: #{tpu_custom_call.1} parent=51 // pred_fallthru
          _
      $region52: #{tpu_custom_call.1} parent=5 // pred_fallthru
        _
    $region6: #{tpu_custom_call.1} parent=1 // loop_footer
      %s19 = sadd.s32 1, %s15
    $region7: #{tpu_custom_call.1} parent=1 // loop_footer_branch
      %14 = sbr.rel target = $region3
    $region8: #{tpu_custom_call.1} parent=1 // loop_exit
      _
    %453 = vsyncpa [#allocation3], 1
    %s454 = scalar_lea.sflag [#allocation3], 1
    %455 = vsyncpa %s454, 1

</llo_original>
